<compile_context>
chip_gen: v5e
topology: v5e:2x2
jax: 0.10.0
libtpu: 0.0.40
codegen_flags: <defaults>
</compile_context>

<pallas_src>
import jax
import jax.numpy as jnp
from jax.experimental import pallas as pl
from jax.experimental.pallas import tpu as pltpu


def encoder_kernel(ids_ref, emb_ref, b_ref, out_ref):
    # ids_ref: (bb*L, 1) int32   token ids for this batch chunk
    # emb_ref: (Vp, H)   bf16    fused (embedding @ W^T) table, vocab zero-padded to Vp
    # b_ref:   (1, H)    f32     Linear bias
    # out_ref: (bb, H)   f32     max-pooled encodings for this batch chunk
    bb, H = out_ref.shape
    L = ids_ref.shape[0] // bb
    vocab_p = emb_ref.shape[0]

    ids = ids_ref[...]                                                   # (bb*L, 1)
    cols = jax.lax.broadcasted_iota(jnp.int32, (bb * L, vocab_p), 1)     # (bb*L, Vp)
    onehot = (ids == cols).astype(jnp.bfloat16)                          # exact 0/1 in bf16

    # Fused embedding gather + Linear in a single MXU matmul (K = Vp = 128-aligned),
    # bf16 operands, f32 accumulation.  Rows with out-of-range ids select padded
    # zero rows (PyTorch nn.Embedding would raise instead).
    y = jnp.dot(onehot, emb_ref[...], preferred_element_type=jnp.float32)  # (bb*L, H) f32

    # MaxPool1d(L) over the sequence axis; bias added once after the max
    # (b is constant over L, so max(y + b) == max(y) + b).  bb*L and L are
    # multiples of 8, so the reshape is sublane-aligned and copy-free.
    pooled = jnp.max(y.reshape(bb, L, H), axis=1)                        # (bb, H)
    out_ref[...] = (pooled + b_ref[...]).astype(out_ref.dtype)


def sensents_encoder(token_ids, emb_table, w, b, *, block_b=None):
    """token_ids: int [B, L]; emb_table: [V+1, H]; w: [H, H] (out, in); b: [H]."""
    B, L = token_ids.shape
    V1, H = emb_table.shape

    if block_b is None:
        # >=2 grid steps (feeds both v7x TCs) while keeping block_b a multiple of 8
        # so the (block_b, H) output store is unmasked; fall back to one step.
        block_b = 8 if (B % 8 == 0 and B >= 16) else B
    assert B % block_b == 0, "batch must be divisible by block_b"
    if block_b < B:
        assert block_b % 8 == 0, "tiled block_b must be a multiple of 8 (sublane-dense store)"
    grid = (B // block_b,)

    # One-time glue outside the kernel hot path.
    ids2d = token_ids.astype(jnp.int32).reshape(B * L, 1)
    v1p = ((V1 + 127) // 128) * 128                       # pad K (vocab) to 128 lanes
    emb_fused = emb_table.astype(jnp.float32) @ w.astype(jnp.float32).T    # (V1, H)
    emb_fused = jnp.pad(emb_fused, ((0, v1p - V1), (0, 0))).astype(jnp.bfloat16)
    b2 = b.astype(jnp.float32).reshape(1, H)

    out = pl.pallas_call(
        encoder_kernel,
        out_shape=jax.ShapeDtypeStruct((B, H), jnp.float32),
        grid_spec=pltpu.PrefetchScalarGridSpec(
            num_scalar_prefetch=0,
            grid=grid,
            in_specs=[
                pl.BlockSpec((block_b * L, 1), lambda i: (i, 0)),
                pl.BlockSpec((v1p, H), lambda i: (0, 0)),
                pl.BlockSpec((1, H), lambda i: (0, 0)),
            ],
            out_specs=pl.BlockSpec((block_b, H), lambda i: (i, 0)),
        ),
        compiler_params=pltpu.CompilerParams(
            dimension_semantics=("parallel",),
            vmem_limit_bytes=32 * 1024 * 1024,
        ),
    )(ids2d, emb_fused, b2)
    return out, emb_fused


if __name__ == "__main__":
    # Small shapes consistent with the module's forward:
    #   vocab_size = 50 (embedding table has vocab_size + 1 rows)
    #   hidden_size = 128, sentence_len = 8, batch = 16 (two 8-row grid steps)
    VOCAB = 50
    H = 128
    L = 8
    B = 16

    key = jax.random.PRNGKey(0)
    k_ids, k_emb, k_w, k_b = jax.random.split(key, 4)

    token_ids = jax.random.randint(k_ids, (B, L), 0, VOCAB + 1, dtype=jnp.int32)
    emb_table = jax.random.normal(k_emb, (VOCAB + 1, H), dtype=jnp.float32) * 0.02
    w = jax.random.normal(k_w, (H, H), dtype=jnp.float32) * 0.02
    b = jax.random.normal(k_b, (H,), dtype=jnp.float32) * 0.02

    out, emb_fused_bf16 = sensents_encoder(token_ids, emb_table, w, b)
    out = jax.block_until_ready(out)
    assert out.shape == (B, H)

    # 1) Exact-path reference: the bf16 fused-table gather + f32 max/bias the
    #    kernel computes (one-hot matmul of 0/1 bf16 weights is an exact row select).
    ref_bf16 = jnp.max(
        jnp.take(emb_fused_bf16, token_ids, axis=0).astype(jnp.float32), axis=1
    ) + b
    assert jnp.allclose(out, ref_bf16, atol=1e-5, rtol=1e-5), float(
        jnp.max(jnp.abs(out - ref_bf16))
    )

    # 2) Pure-f32 reference of the original module semantics (bf16 table cast
    #    only changes results at the rounding level).
    ref_f32 = jnp.max(jnp.take(emb_table, token_ids, axis=0) @ w.T + b, axis=1)
    assert jnp.allclose(out, ref_f32, atol=2e-3, rtol=2e-3), float(
        jnp.max(jnp.abs(out - ref_f32))
    )

    print("KERNEL_OK")
</pallas_src>

<mosaic_0001>
module attributes {stable_mosaic.version = 11 : i64} {
  func.func @encoder_kernel(%arg0: i32, %arg1: memref<64x1xi32, #tpu.memory_space<vmem>>, %arg2: memref<128x128xbf16, #tpu.memory_space<vmem>>, %arg3: memref<1x128xf32, #tpu.memory_space<vmem>>, %arg4: memref<8x128xf32, #tpu.memory_space<vmem>>) attributes {dimension_semantics = [#tpu.dimension_semantics<parallel>], iteration_bounds = array<i64: 2>, scalar_prefetch = 0 : i64, scratch_operands = 0 : i64, tpu.core_type = #tpu.core_type<tc>, window_params = [{transform_indices = @transform_0, window_bounds = array<i64: 64, 1>}, {pipeline_mode = #tpu.pipeline_mode<synchronous>, transform_indices = @transform_1, window_bounds = array<i64: 128, 128>}, {pipeline_mode = #tpu.pipeline_mode<synchronous>, transform_indices = @transform_2, window_bounds = array<i64: 1, 128>}, {transform_indices = @transform_3, window_bounds = array<i64: 8, 128>}]} {
    %c0 = arith.constant 0 : index
    %c0_0 = arith.constant 0 : index
    %0 = vector.load %arg1[%c0, %c0_0] : memref<64x1xi32, #tpu.memory_space<vmem>>, vector<64x1xi32>
    %1 = tpu.iota {dimensions = array<i32: 1>} : vector<64x128xi32>
    %2 = vector.broadcast %0 : vector<64x1xi32> to vector<64x128xi32>
    %3 = arith.cmpi eq, %2, %1 : vector<64x128xi32>
    %4 = arith.extui %3 : vector<64x128xi1> to vector<64x128xi32>
    %5 = arith.sitofp %4 : vector<64x128xi32> to vector<64x128xf32>
    %6 = arith.truncf %5 : vector<64x128xf32> to vector<64x128xbf16>
    %c0_1 = arith.constant 0 : index
    %c0_2 = arith.constant 0 : index
    %7 = vector.load %arg2[%c0_1, %c0_2] : memref<128x128xbf16, #tpu.memory_space<vmem>>, vector<128x128xbf16>
    %cst = arith.constant dense<0.000000e+00> : vector<64x128xf32>
    %8 = tpu.matmul %6, %7, %cst {dimension_numbers = #tpu.dot_dimension_numbers<[1], [0], [0], [1], [0, 0, 1, 1], [], []>} : vector<64x128xbf16>, vector<128x128xbf16>, vector<64x128xf32> -> vector<64x128xf32>
    %9 = vector.shape_cast %8 : vector<64x128xf32> to vector<8x8x128xf32>
    %cst_3 = arith.constant dense<0xFF800000> : vector<8x128xf32>
    %10 = vector.multi_reduction <maximumf>, %9, %cst_3 [1] : vector<8x8x128xf32> to vector<8x128xf32>
    %c0_4 = arith.constant 0 : index
    %c0_5 = arith.constant 0 : index
    %11 = vector.load %arg3[%c0_4, %c0_5] : memref<1x128xf32, #tpu.memory_space<vmem>>, vector<1x128xf32>
    %12 = vector.broadcast %11 : vector<1x128xf32> to vector<8x128xf32>
    %13 = arith.addf %10, %12 : vector<8x128xf32>
    %c0_6 = arith.constant 0 : index
    %c0_7 = arith.constant 0 : index
    %14 = vector.load %arg4[%c0_6, %c0_7] : memref<8x128xf32, #tpu.memory_space<vmem>>, vector<8x128xf32>
    tpu.vector_store %arg4[%c0_6, %c0_7], %13 {strides = array<i32>} : memref<8x128xf32, #tpu.memory_space<vmem>>, vector<8x128xf32>,
    return
  }
  func.func @transform_0(%arg0: i32) -> (i32, i32) {
    %c0_i32 = arith.constant 0 : i32
    %c0_i32_0 = arith.constant 0 : i32
    return %arg0, %c0_i32 : i32, i32
  }
  func.func @transform_1(%arg0: i32) -> (i32, i32) {
    %c0_i32 = arith.constant 0 : i32
    %c0_i32_0 = arith.constant 0 : i32
    %c0_i32_1 = arith.constant 0 : i32
    return %c0_i32, %c0_i32_0 : i32, i32
  }
  func.func @transform_2(%arg0: i32) -> (i32, i32) {
    %c0_i32 = arith.constant 0 : i32
    %c0_i32_0 = arith.constant 0 : i32
    %c0_i32_1 = arith.constant 0 : i32
    return %c0_i32, %c0_i32_0 : i32, i32
  }
  func.func @transform_3(%arg0: i32) -> (i32, i32) {
    %c0_i32 = arith.constant 0 : i32
    %c0_i32_0 = arith.constant 0 : i32
    return %arg0, %c0_i32 : i32, i32
  }
}

</mosaic_0001>

<llo_original>
// kernel: tpu_custom_call.1
$region0: #{tpu_custom_call.1}
  #allocation0 [shape = 'u32[]', space=smem, size = 0x4, offset = 0x4, fixed_abs, tag = 'smem constant byte address 0x4 - core index']
  #allocation1 [shape = 'u32[72,128]{1,0:T(1,128)}', space=vmem, size = 0x9000, scoped, tag = 'internal scratch']
  %s0 = inlined_call_operand.vmem [shape: s32[128,1], index: 0, kind: input, shape index: {}]
  %s1 = inlined_call_operand.vmem [shape: bf16[128,128], index: 1, kind: input, shape index: {}]
  %s2 = inlined_call_operand.vmem [shape: f32[1,128], index: 2, kind: input, shape index: {}]
  %s3 = inlined_call_operand.hbm [shape: f32[16,128], index: 3, kind: output, shape index: {}]
  %s4 = sld [smem:[#allocation0]]
  $region45: #{tpu_custom_call.1} parent=0
    _
  %s6 = ssub.s32 1, %s4
  %s7 = scalar_select 0, %s6, %s4
  $region1: #{tpu_custom_call.1} parent=0
    #allocation2 [shape = 'u8[8192]{0}', space=vmem, size = 0x2000, scoped, tag = 'output window, operand 0']
    #allocation3 [shape = 's32[2]{0}', space=sflag, size = 0x8, scoped, tag = 'scoped memory for tpu_custom_call.1']
    %8 = vsyncpa [#allocation3], 0
    %s9 = scalar_lea.sflag [#allocation3], 1
    %10 = vsyncpa %s9, 0
    loop: start=0, step=1, limit=4
    $region2: #{tpu_custom_call.1} parent=1 // loop_pre_header
      _
    $region3: #{tpu_custom_call.1} parent=1 // loop_header
      %s12 = sphi 0, %s16
      %p13 = scmp.ge.s32.totalorder %s12, 4
      %s22 = sphi 0, %s24
      %s25 = sphi 0, %s22
      %s26 = sphi 0, %s25
      %s42 = sphi 0, %s26
      %s46 = sphi 0, %s46
      %s48 = sphi 0, %s46
      %s49 = sphi 0, %s48
      %s63 = sphi 0, %s49
      %s67 = sphi 0, %s67
      %s69 = sphi 0, %s67
      %s70 = sphi 0, %s69
      %s84 = sphi 0, %s70
      %s90 = sphi 0, %s92
      %s93 = sphi 0, %s90
      %s94 = sphi 0, %s93
      %s110 = sphi 0, %s94
    $region4: #{tpu_custom_call.1} parent=1 // loop_header_branch
      %15 = sbr.rel (%p13) target = $region8
    $region5: #{tpu_custom_call.1} parent=1 // loop_body
      %s17 = ssub.s32 %s12, 1
      %s18 = ssub.s32 %s12, 2
      %s19 = sadd.s32 %s12, 1
      %s20 = ssub.s32 %s12, %s19
      %p21 = scmp.eq.s32.totalorder %s20, 0
      %s23 = sadd.s32 %s22, 1
      %s24 = scalar_select %p21, %s22, %s23
      %p27 = pneg %p21
      %p28 = scmp.eq.s32.totalorder %s12, 1
      %p29 = por %p27, %p28
      %p30 = scmp.ne.s32.totalorder %s22, %s25
      %p31 = scmp.eq.s32.totalorder %s12, 0
      %p32 = por %p30, %p31
      %p33 = scmp.ne.s32.totalorder %s22, %s25
      %p34 = scmp.eq.s32.totalorder %s17, 1
      %p35 = por %p33, %p34
      %p36 = scmp.ne.s32.totalorder %s25, %s26
      %p37 = scmp.eq.s32.totalorder %s17, 0
      %p38 = por %p36, %p37
      %p39 = scmp.ne.s32.totalorder %s25, %s26
      %p40 = scmp.eq.s32.totalorder %s18, 1
      %p41 = por %p39, %p40
      %p43 = scmp.ne.s32.totalorder %s26, %s42
      %p44 = scmp.eq.s32.totalorder %s18, 0
      %p45 = por %p43, %p44
      %s47 = sadd.s32 %s46, 1
      %p50 = scmp.eq.s32.totalorder %s12, 1
      %p51 = scmp.ne.s32.totalorder %s46, %s48
      %p52 = scmp.eq.s32.totalorder %s12, 0
      %p53 = por %p51, %p52
      %p54 = scmp.ne.s32.totalorder %s46, %s48
      %p55 = scmp.eq.s32.totalorder %s17, 1
      %p56 = por %p54, %p55
      %p57 = scmp.ne.s32.totalorder %s48, %s49
      %p58 = scmp.eq.s32.totalorder %s17, 0
      %p59 = por %p57, %p58
      %p60 = scmp.ne.s32.totalorder %s48, %s49
      %p61 = scmp.eq.s32.totalorder %s18, 1
      %p62 = por %p60, %p61
      %p64 = scmp.ne.s32.totalorder %s49, %s63
      %p65 = scmp.eq.s32.totalorder %s18, 0
      %p66 = por %p64, %p65
      %s68 = sadd.s32 %s67, 1
      %p71 = scmp.eq.s32.totalorder %s12, 1
      %p72 = scmp.ne.s32.totalorder %s67, %s69
      %p73 = scmp.eq.s32.totalorder %s12, 0
      %p74 = por %p72, %p73
      %p75 = scmp.ne.s32.totalorder %s67, %s69
      %p76 = scmp.eq.s32.totalorder %s17, 1
      %p77 = por %p75, %p76
      %p78 = scmp.ne.s32.totalorder %s69, %s70
      %p79 = scmp.eq.s32.totalorder %s17, 0
      %p80 = por %p78, %p79
      %p81 = scmp.ne.s32.totalorder %s69, %s70
      %p82 = scmp.eq.s32.totalorder %s18, 1
      %p83 = por %p81, %p82
      %p85 = scmp.ne.s32.totalorder %s70, %s84
      %p86 = scmp.eq.s32.totalorder %s18, 0
      %p87 = por %p85, %p86
      %s88 = ssub.s32 %s12, %s19
      %p89 = scmp.eq.s32.totalorder %s88, 0
      %s91 = sadd.s32 %s90, 1
      %s92 = scalar_select %p89, %s90, %s91
      %p95 = pneg %p89
      %p96 = scmp.eq.s32.totalorder %s12, 1
      %p97 = por %p95, %p96
      %p98 = scmp.ne.s32.totalorder %s90, %s93
      %p99 = scmp.eq.s32.totalorder %s12, 0
      %p100 = por %p98, %p99
      %p101 = scmp.ne.s32.totalorder %s90, %s93
      %p102 = scmp.eq.s32.totalorder %s17, 1
      %p103 = por %p101, %p102
      %p104 = scmp.ne.s32.totalorder %s93, %s94
      %p105 = scmp.eq.s32.totalorder %s17, 0
      %p106 = por %p104, %p105
      %p107 = scmp.ne.s32.totalorder %s93, %s94
      %p108 = scmp.eq.s32.totalorder %s18, 1
      %p109 = por %p107, %p108
      %p111 = scmp.ne.s32.totalorder %s94, %s110
      %p112 = scmp.eq.s32.totalorder %s18, 0
      %p113 = por %p111, %p112
      %p114 = scmp.le.s32.totalorder 1, %s12
      %p115 = scmp.lt.s32.totalorder %s12, 3
      %p116 = pnand %p114, %p115
      %p117 = pneg %p116
      // Predicated region
      $region9: #{tpu_custom_call.1} parent=5 // pred_check
        _
      $region10: #{tpu_custom_call.1} parent=5 // pred_check_branch
        %119 = sbr.rel (%p116) target = $region12
      $region11: #{tpu_custom_call.1} parent=5 // pred_region
        %s120 = ssub.s32 %s12, 1
        // Predicated region
        $region13: #{tpu_custom_call.1} parent=11 // pred_check
          %p121 = pneg %p59
        $region14: #{tpu_custom_call.1} parent=11 // pred_check_branch
          %123 = sbr.rel (%p121) target = $region16
        $region15: #{tpu_custom_call.1} parent=11 // pred_region
          _
        $region16: #{tpu_custom_call.1} parent=11 // pred_fallthru
          _
        // Predicated region
        $region17: #{tpu_custom_call.1} parent=11 // pred_check
          %p124 = pneg %p80
        $region18: #{tpu_custom_call.1} parent=11 // pred_check_branch
          %126 = sbr.rel (%p124) target = $region20
        $region19: #{tpu_custom_call.1} parent=11 // pred_region
          _
        $region20: #{tpu_custom_call.1} parent=11 // pred_fallthru
          _
      $region12: #{tpu_custom_call.1} parent=5 // pred_fallthru
        _
      %p127 = scmp.lt.s32.totalorder %s12, 2
      // Predicated region
      $region21: #{tpu_custom_call.1} parent=5 // pred_check
        %p128 = pneg %p127
      $region22: #{tpu_custom_call.1} parent=5 // pred_check_branch
        %130 = sbr.rel (%p128) target = $region24
      $region23: #{tpu_custom_call.1} parent=5 // pred_region
        // Predicated region
        $region25: #{tpu_custom_call.1} parent=23 // pred_check
          %p131 = pneg %p32
        $region26: #{tpu_custom_call.1} parent=23 // pred_check_branch
          %133 = sbr.rel (%p131) target = $region28
        $region27: #{tpu_custom_call.1} parent=23 // pred_region
          %s134 = smul.u32 8, %s12
          %p135 = scmp.lt.s32.totalorder %s134, 15
          %s136 = scalar_select %p135, %s134, 15
          %s137 = smul.addr %s136, 8
          %s138 = scalar_lea.vmem %s0, %s137
          %s139 = smul.u32 8, %s12
        $region28: #{tpu_custom_call.1} parent=23 // pred_fallthru
          _
      $region24: #{tpu_custom_call.1} parent=5 // pred_fallthru
        _
      %p140 = scmp.le.s32.totalorder 1, %s12
      %p141 = scmp.lt.s32.totalorder %s12, 3
      %p142 = pnand %p140, %p141
      %p143 = pneg %p142
      // Predicated region
      $region29: #{tpu_custom_call.1} parent=5 // pred_check
        _
      $region30: #{tpu_custom_call.1} parent=5 // pred_check_branch
        %145 = sbr.rel (%p142) target = $region32
      $region31: #{tpu_custom_call.1} parent=5 // pred_region
        %s146 = ssub.s32 %s12, 1
        %s147 = smul.u32 8, %s17
        %p148 = scmp.lt.s32.totalorder %s147, 15
        %s149 = scalar_select %p148, %s147, 15
        %s150 = smul.addr %s149, 8
        %s151 = scalar_lea.vmem %s0, %s150
        %p152 = pneg %p38
        %p153 = pneg %p35
        %p154 = pneg %p59
        %p155 = pneg %p56
        %p156 = pneg %p80
        %p157 = pneg %p77
        %p158 = pneg %p106
        %p159 = pneg %p103
        %s160 = sand.u32 %s93, 1
        %s161 = scalar_lea.sflag [#allocation3], %s160
        %s162 = sand.u32 %s93, 1
        %s163 = smul.addr %s162, 8
        %s164 = scalar_lea.vmem [#allocation2], %s163
        %s165 = smul.u32 8, %s17
        %p166 = scmp.lt.s32.totalorder %s165, 15
        %s167 = scalar_select %p166, %s165, 15
        %s168 = smul.addr %s167, 8
        %s169 = scalar_lea.vmem %s0, %s168
        %s170 = smul.u32 8, %s17
        %v171 = vld [vmem:[%s169] sm:$0xff]
        %v172 = vld [vmem:[%s169 + $0x8] sm:$0xff]
        %v173 = vld [vmem:[%s169 + $0x10] sm:$0xff]
        %v174 = vld [vmem:[%s169 + $0x18] sm:$0xff]
        %v175 = vld [vmem:[%s169 + $0x20] sm:$0xff]
        %v176 = vld [vmem:[%s169 + $0x28] sm:$0xff]
        %v177 = vld [vmem:[%s169 + $0x30] sm:$0xff]
        %v178 = vld [vmem:[%s169 + $0x38] sm:$0xff]
        %v179 = vlaneseq
        %v180 = vand.u32 %v179, 127
        %181 = vset.pattern.permute.xlu0 0
        %182 = vperm.xlu0 %181, %v171
        %v183 = vpop.permute.xlu0 %182
        %184 = vset.pattern.permute.xlu0 0
        %185 = vperm.xlu0 %184, %v172
        %v186 = vpop.permute.xlu0 %185
        %187 = vset.pattern.permute.xlu0 0
        %188 = vperm.xlu0 %187, %v173
        %v189 = vpop.permute.xlu0 %188
        %190 = vset.pattern.permute.xlu0 0
        %191 = vperm.xlu0 %190, %v174
        %v192 = vpop.permute.xlu0 %191
        %193 = vset.pattern.permute.xlu0 0
        %194 = vperm.xlu0 %193, %v175
        %v195 = vpop.permute.xlu0 %194
        %196 = vset.pattern.permute.xlu0 0
        %197 = vperm.xlu0 %196, %v176
        %v198 = vpop.permute.xlu0 %197
        %199 = vset.pattern.permute.xlu0 0
        %200 = vperm.xlu0 %199, %v177
        %v201 = vpop.permute.xlu0 %200
        %202 = vset.pattern.permute.xlu0 0
        %203 = vperm.xlu0 %202, %v178
        %v204 = vpop.permute.xlu0 %203
        %vm205 = vcmp.eq.s32.totalorder %v183, %v180
        %vm206 = vcmp.eq.s32.totalorder %v186, %v180
        %vm207 = vcmp.eq.s32.totalorder %v189, %v180
        %vm208 = vcmp.eq.s32.totalorder %v192, %v180
        %vm209 = vcmp.eq.s32.totalorder %v195, %v180
        %vm210 = vcmp.eq.s32.totalorder %v198, %v180
        %vm211 = vcmp.eq.s32.totalorder %v201, %v180
        %vm212 = vcmp.eq.s32.totalorder %v204, %v180
        %v213 = vsel %vm205, 1, 0
        %v214 = vsel %vm206, 1, 0
        %v215 = vsel %vm207, 1, 0
        %v216 = vsel %vm208, 1, 0
        %v217 = vsel %vm209, 1, 0
        %v218 = vsel %vm210, 1, 0
        %v219 = vsel %vm211, 1, 0
        %v220 = vsel %vm212, 1, 0
        %v221 = vcvt.s32.f32 %v213
        %v222 = vcvt.s32.f32 %v214
        %v223 = vcvt.s32.f32 %v215
        %v224 = vcvt.s32.f32 %v216
        %v225 = vcvt.s32.f32 %v217
        %v226 = vcvt.s32.f32 %v218
        %v227 = vcvt.s32.f32 %v219
        %v228 = vcvt.s32.f32 %v220
        %v229 = vpack.c.bf16 %v222, %v221
        %v230 = vpack.c.bf16 %v224, %v223
        %v231 = vpack.c.bf16 %v226, %v225
        %v232 = vpack.c.bf16 %v228, %v227
        %v233 = vld [vmem:[%s1] sm:$0xf]
        %v234 = vld [vmem:[%s1 + $0x4] sm:$0xf]
        %v235 = vld [vmem:[%s1 + $0x8] sm:$0xf]
        %v236 = vld [vmem:[%s1 + $0xc] sm:$0xf]
        %v237 = vld [vmem:[%s1 + $0x10] sm:$0xf]
        %v238 = vld [vmem:[%s1 + $0x14] sm:$0xf]
        %v239 = vld [vmem:[%s1 + $0x18] sm:$0xf]
        %v240 = vld [vmem:[%s1 + $0x1c] sm:$0xf]
        %v241 = vld [vmem:[%s1 + $0x20] sm:$0xf]
        %v242 = vld [vmem:[%s1 + $0x24] sm:$0xf]
        %v243 = vld [vmem:[%s1 + $0x28] sm:$0xf]
        %v244 = vld [vmem:[%s1 + $0x2c] sm:$0xf]
        %v245 = vld [vmem:[%s1 + $0x30] sm:$0xf]
        %v246 = vld [vmem:[%s1 + $0x34] sm:$0xf]
        %v247 = vld [vmem:[%s1 + $0x38] sm:$0xf]
        %v248 = vld [vmem:[%s1 + $0x3c] sm:$0xf]
        %v265 = vunpack.c.l.b16 %v233
        %v266 = vunpack.c.l.b16 %v234
        %v267 = vunpack.c.l.b16 %v235
        %v268 = vunpack.c.l.b16 %v236
        %v269 = vunpack.c.l.b16 %v237
        %v270 = vunpack.c.l.b16 %v238
        %v271 = vunpack.c.l.b16 %v239
        %v272 = vunpack.c.l.b16 %v240
        %v273 = vunpack.c.l.b16 %v241
        %v274 = vunpack.c.l.b16 %v242
        %v275 = vunpack.c.l.b16 %v243
        %v276 = vunpack.c.l.b16 %v244
        %v277 = vunpack.c.l.b16 %v245
        %v278 = vunpack.c.l.b16 %v246
        %v279 = vunpack.c.l.b16 %v247
        %v280 = vunpack.c.l.b16 %v248
        %v281 = vpack.c.b16 %v266, %v265
        %v282 = vpack.c.b16 %v268, %v267
        %v283 = vpack.c.b16 %v270, %v269
        %v284 = vpack.c.b16 %v272, %v271
        %v285 = vpack.c.b16 %v274, %v273
        %v286 = vpack.c.b16 %v276, %v275
        %v287 = vpack.c.b16 %v278, %v277
        %v288 = vpack.c.b16 %v280, %v279
        %297 = vmatpush.bf16.msra.mxu0 %v288
        %298 = vmatpush.bf16.msra.mxu0 %v287
        %299 = vmatpush.bf16.msra.mxu0 %v286
        %300 = vmatpush.bf16.msra.mxu0 %v285
        %301 = vmatpush.bf16.msra.mxu0 %v284
        %302 = vmatpush.bf16.msra.mxu0 %v283
        %303 = vmatpush.bf16.msra.mxu0 %v282
        %304 = vmatpush.bf16.msra.mxu0 %v281
        %305 = vmatmul.bf16.gmra.mxu0 %v229
        %v306 = vpop.f32.mrf.mxu0
        %v307 = vadd.f32 0.0, %v306
        %v308 = vpop.f32.mrf.mxu0
        %v309 = vadd.f32 0.0, %v308
        %310 = vmatmul.bf16.gmra.mxu0 %v230
        %v311 = vpop.f32.mrf.mxu0
        %v312 = vadd.f32 0.0, %v311
        %v313 = vpop.f32.mrf.mxu0
        %v314 = vadd.f32 0.0, %v313
        %315 = vmatmul.bf16.gmra.mxu0 %v231
        %v316 = vpop.f32.mrf.mxu0
        %v317 = vadd.f32 0.0, %v316
        %v318 = vpop.f32.mrf.mxu0
        %v319 = vadd.f32 0.0, %v318
        %320 = vmatmul.bf16.gmra.mxu0 %v232
        %v321 = vpop.f32.mrf.mxu0
        %v322 = vadd.f32 0.0, %v321
        %v323 = vpop.f32.mrf.mxu0
        %v324 = vadd.f32 0.0, %v323
        %325 = vdwg.mxu0
        %v326 = vrot.slane %v307, 4
        %v327 = vmax.f32 %v307, %v326
        %v328 = vrot.slane %v327, 2
        %v329 = vmax.f32 %v327, %v328
        %v330 = vrot.slane %v329, 1
        %v331 = vmax.f32 %v329, %v330
        %v332 = vrot.slane %v309, 4
        %v333 = vmax.f32 %v309, %v332
        %v334 = vrot.slane %v333, 2
        %v335 = vmax.f32 %v333, %v334
        %v336 = vrot.slane %v335, 1
        %v337 = vmax.f32 %v335, %v336
        %v338 = vrot.slane %v312, 4
        %v339 = vmax.f32 %v312, %v338
        %v340 = vrot.slane %v339, 2
        %v341 = vmax.f32 %v339, %v340
        %v342 = vrot.slane %v341, 1
        %v343 = vmax.f32 %v341, %v342
        %v344 = vrot.slane %v314, 4
        %v345 = vmax.f32 %v314, %v344
        %v346 = vrot.slane %v345, 2
        %v347 = vmax.f32 %v345, %v346
        %v348 = vrot.slane %v347, 1
        %v349 = vmax.f32 %v347, %v348
        %v350 = vrot.slane %v317, 4
        %v351 = vmax.f32 %v317, %v350
        %v352 = vrot.slane %v351, 2
        %v353 = vmax.f32 %v351, %v352
        %v354 = vrot.slane %v353, 1
        %v355 = vmax.f32 %v353, %v354
        %v356 = vrot.slane %v319, 4
        %v357 = vmax.f32 %v319, %v356
        %v358 = vrot.slane %v357, 2
        %v359 = vmax.f32 %v357, %v358
        %v360 = vrot.slane %v359, 1
        %v361 = vmax.f32 %v359, %v360
        %v362 = vrot.slane %v322, 4
        %v363 = vmax.f32 %v322, %v362
        %v364 = vrot.slane %v363, 2
        %v365 = vmax.f32 %v363, %v364
        %v366 = vrot.slane %v365, 1
        %v367 = vmax.f32 %v365, %v366
        %v368 = vrot.slane %v324, 4
        %v369 = vmax.f32 %v324, %v368
        %v370 = vrot.slane %v369, 2
        %v371 = vmax.f32 %v369, %v370
        %v372 = vrot.slane %v371, 1
        %v373 = vmax.f32 %v371, %v372
        %v374 = vld [vmem:[%s2] sm:$0x1]
        %v376 = vperm.slane %v374, 0
        %v378 = vadd.f32 %v331, %v376
        %v379 = vadd.f32 %v337, %v376
        %v380 = vadd.f32 %v343, %v376
        %v381 = vadd.f32 %v349, %v376
        %v382 = vadd.f32 %v355, %v376
        %v383 = vadd.f32 %v361, %v376
        %v384 = vadd.f32 %v367, %v376
        %v385 = vadd.f32 %v373, %v376
        %v394 = vrot.slane %v379, 7
        %vm395 = vcmask 1041409
        %v396 = vsel %vm395, %v394, %v378
        %v397 = vrot.slane %v380, 6
        %vm398 = vcmask 1042434
        %v399 = vsel %vm398, %v397, %v396
        %v400 = vrot.slane %v381, 5
        %vm401 = vcmask 1043459
        %v402 = vsel %vm401, %v400, %v399
        %v403 = vrot.slane %v382, 4
        %vm404 = vcmask 1044484
        %v405 = vsel %vm404, %v403, %v402
        %v406 = vrot.slane %v383, 3
        %vm407 = vcmask 1045509
        %v408 = vsel %vm407, %v406, %v405
        %v409 = vrot.slane %v384, 2
        %vm410 = vcmask 1046534
        %v411 = vsel %vm410, %v409, %v408
        %v412 = vrot.slane %v385, 1
        %vm413 = vcmask 1047559
        %v414 = vsel %vm413, %v412, %v411
        %416 = vst [vmem:[%s164] sm:$0xff] %v414
        %s417 = sand.u32 %s93, 1
        %s418 = scalar_lea.sflag [#allocation3], %s417
        %s419 = sand.u32 %s93, 1
        %s420 = smul.addr %s419, 8
        %s421 = scalar_lea.vmem [#allocation2], %s420
        // Predicated region
        $region33: #{tpu_custom_call.1} parent=31 // pred_check
          %p422 = pneg %p103
        $region34: #{tpu_custom_call.1} parent=31 // pred_check_branch
          %424 = sbr.rel (%p422) target = $region36
        $region35: #{tpu_custom_call.1} parent=31 // pred_region
          %426 = vsyncadd %s418, 0
          %s427 = smul.addr %s17, 8
          %s428 = scalar_lea.hbm %s3, %s427
          %s430 = sshll.u32 %s421, 4
          %s431 = int_to_ptr.vmem [resolvable:$true] %s430
          %s432 = sshll.u32 %s428, 4
          %s433 = int_to_ptr.hbm [resolvable:$true] %s432
          %435 = dma.vmem_to_hbm [thread:$0]  %s431, 128, %s433, %s418
        $region36: #{tpu_custom_call.1} parent=31 // pred_fallthru
          _
      $region32: #{tpu_custom_call.1} parent=5 // pred_fallthru
        _
      %p436 = scmp.le.s32.totalorder 2, %s12
      // Predicated region
      $region37: #{tpu_custom_call.1} parent=5 // pred_check
        %p437 = pneg %p436
      $region38: #{tpu_custom_call.1} parent=5 // pred_check_branch
        %439 = sbr.rel (%p437) target = $region40
      $region39: #{tpu_custom_call.1} parent=5 // pred_region
        %s440 = ssub.s32 %s12, 2
        // Predicated region
        $region41: #{tpu_custom_call.1} parent=39 // pred_check
          %p441 = pneg %p109
        $region42: #{tpu_custom_call.1} parent=39 // pred_check_branch
          %443 = sbr.rel (%p441) target = $region44
        $region43: #{tpu_custom_call.1} parent=39 // pred_region
          %s444 = sand.u32 %s94, 1
          %s445 = scalar_lea.sflag [#allocation3], %s444
          %s446 = sand.u32 %s94, 1
          %s447 = smul.addr %s446, 8
          %s448 = scalar_lea.vmem [#allocation2], %s447
          %450 = dma.done %s445, 128
        $region44: #{tpu_custom_call.1} parent=39 // pred_fallthru
          _
      $region40: #{tpu_custom_call.1} parent=5 // pred_fallthru
        _
    $region6: #{tpu_custom_call.1} parent=1 // loop_footer
      %s16 = sadd.s32 1, %s12
    $region7: #{tpu_custom_call.1} parent=1 // loop_footer_branch
      %11 = sbr.rel target = $region3
    $region8: #{tpu_custom_call.1} parent=1 // loop_exit
      _
    %451 = vsyncpa [#allocation3], 1
    %s452 = scalar_lea.sflag [#allocation3], 1
    %453 = vsyncpa %s452, 1

</llo_original>
